<compile_context>
chip_gen: v5e
topology: v5e:2x2
jax: 0.10.0
libtpu: 0.0.40
codegen_flags: <defaults>
</compile_context>

<pallas_src>
import functools

import jax
import jax.numpy as jnp
from jax.experimental import pallas as pl
from jax.experimental.pallas import tpu as pltpu


def _conv_bn_relu_pool_kernel(s_ref, w_ref, scale_ref, bias_ref, o_ref):
    """One (batch, pool-row-block) step.

    s_ref     : (band, Ws, G)  bf16  space-to-depth input band (band = 2*Pb + 2,
                                     G = 4*C1, includes 1-row halo on each side)
    w_ref     : (4, G, C2)     bf16  conv weights regrouped per shifted window
    scale_ref : (1, C2)        f32   folded BatchNorm scale
    bias_ref  : (1, C2)        f32   folded BatchNorm bias
    o_ref     : (Pb, Pw*C2)          pooled output block (lane-dense store)
    """
    band, Ws, G = s_ref.shape
    nc = band - 1            # conv rows computed in this block (= 2*Pb + 1)
    Wo = Ws - 1              # conv output width
    Pw = Wo // 2             # pooled width
    Pb = o_ref.shape[0]      # pooled rows in this block
    C2 = scale_ref.shape[1]

    # ---- 3x3 / stride-2 conv as 4 MXU GEMMs over unit-shifted s2d windows ----
    S = s_ref[...]                                           # (band, Ws, G) bf16

    def win(dr, dc):
        return S[dr:dr + nc, dc:dc + Wo, :].reshape(nc * Wo, G)

    acc = jnp.dot(win(0, 0), w_ref[0], preferred_element_type=jnp.float32)
    acc = acc + jnp.dot(win(0, 1), w_ref[1], preferred_element_type=jnp.float32)
    acc = acc + jnp.dot(win(1, 0), w_ref[2], preferred_element_type=jnp.float32)
    acc = acc + jnp.dot(win(1, 1), w_ref[3], preferred_element_type=jnp.float32)

    # ---- folded BatchNorm + ReLU (f32) ----
    y = jnp.maximum(acc * scale_ref[...] + bias_ref[...], 0.0)   # (nc*Wo, C2)

    # ---- the first conv row of row-block 0 is the pool's top padding: mask to 0
    # (0 is exact padding because all real values are post-ReLU >= 0)
    row_id = jax.lax.broadcasted_iota(jnp.int32, (nc * Wo, 1), 0)
    y = jnp.where(jnp.logical_and(pl.program_id(1) == 0, row_id < Wo), 0.0, y)

    # ---- 3x3 / stride-2 / pad-1 max pool, fully vectorized ----
    # Pool row i covers conv (local) rows {2i, 2i+1, 2i+2}.
    y3 = y.reshape(nc, Wo, C2)
    ye = y3[0:nc - 1].reshape(Pb, 2, Wo, C2)                 # rows 2i / 2i+1
    r2 = y3[1:nc].reshape(Pb, 2, Wo, C2)[:, 1]               # rows 2i+2
    row_max = jnp.maximum(jnp.maximum(ye[:, 0], ye[:, 1]), r2)   # (Pb, Wo, C2)

    # Pool col j covers conv cols {2j-1, 2j, 2j+1}; col -1 is zero padding.
    rm = row_max.reshape(Pb, Pw, 2, C2)
    c_even = rm[:, :, 0, :]                                  # cols 2j
    c_odd = rm[:, :, 1, :]                                   # cols 2j+1
    c_prev = jnp.concatenate(                                # cols 2j-1 (shift by 1)
        [jnp.zeros((Pb, 1, C2), jnp.float32), c_odd[:, :Pw - 1, :]], axis=1)
    pooled = jnp.maximum(jnp.maximum(c_even, c_odd), c_prev)    # (Pb, Pw, C2)

    # ---- single lane-dense store of the whole output block ----
    o_ref[...] = pooled.reshape(Pb, Pw * C2).astype(o_ref.dtype)


@functools.partial(jax.jit, static_argnames=("pool_rows_per_block",))
def conv_maxpool_pallas(x, conv_w, bn_gamma, bn_beta, bn_mean, bn_var,
                        *, pool_rows_per_block=16, eps=1e-5):
    """x: (B, C1, H, W) NCHW. conv_w: (C2, C1, 3, 3) OIHW (PyTorch layout).
    Returns (B, C2, H//4, W//4) NCHW, matching Conv_maxpool.forward (eval mode)."""
    B, C1, H, W = x.shape
    C2 = conv_w.shape[0]
    assert H % 4 == 0 and W % 4 == 0, "kernel assumes H, W divisible by 4"
    Ho, Wo = H // 2, W // 2          # conv (k3, s2, p1) output
    Ph, Pw = Ho // 2, Wo // 2        # maxpool (k3, s2, p1) output
    G = 4 * C1                       # space-to-depth channel groups

    # Pool rows per grid step (divisor of Ph): bounded per-step VMEM + pipelining.
    # Pick smaller values for large images / v7x (64 MiB VMEM) or v5e.
    Pb = max(1, min(pool_rows_per_block, Ph))
    while Ph % Pb:
        Pb -= 1
    R = Ph // Pb
    band = 2 * Pb + 2                # s2d rows needed per block (incl. 2-row halo)

    # ---- wrapper-side layout plumbing (XLA): NCHW->NHWC, pad, 2x2 space-to-depth.
    # No 9x im2col in HBM — s2d is a pure permutation of the padded input.
    x_nhwc = jnp.transpose(x, (0, 2, 3, 1))
    xp = jnp.pad(x_nhwc, ((0, 0), (1, 1), (1, 1), (0, 0)))
    Hs, Ws = (H + 2) // 2, (W + 2) // 2
    s2d = xp.reshape(B, Hs, 2, Ws, 2, C1).transpose(0, 1, 3, 2, 4, 5)
    s2d = s2d.reshape(B, Hs, Ws, G)
    s2d = jnp.pad(s2d, ((0, 0), (1, 0), (0, 0), (0, 0)))      # top halo row (zeros)
    # Overlapping row bands (2 duplicated rows per band -> simple Blocked indexing).
    bands = jnp.stack(
        [s2d[:, 2 * Pb * r: 2 * Pb * r + band] for r in range(R)], axis=1)
    bands = bands.reshape(B * R, band, Ws, G).astype(jnp.bfloat16)

    # ---- conv weights regrouped per shifted s2d window; bf16, VMEM-resident ----
    w = jnp.transpose(conv_w, (2, 3, 1, 0)).astype(jnp.float32)   # (kh, kw, C1, C2)
    z = jnp.zeros((C1, C2), jnp.float32)
    w_stack = jnp.stack([
        jnp.concatenate([w[0, 0], w[0, 1], w[1, 0], w[1, 1]], axis=0),  # window (0,0)
        jnp.concatenate([w[0, 2], z,       w[1, 2], z],       axis=0),  # window (0,1)
        jnp.concatenate([w[2, 0], w[2, 1], z,       z],       axis=0),  # window (1,0)
        jnp.concatenate([w[2, 2], z,       z,       z],       axis=0),  # window (1,1)
    ], axis=0).astype(jnp.bfloat16)                                      # (4, G, C2)

    # ---- inference-mode BatchNorm folded to per-channel scale / bias (f32) ----
    inv_std = jax.lax.rsqrt(bn_var.astype(jnp.float32) + eps)
    scale = (bn_gamma * inv_std).reshape(1, C2).astype(jnp.float32)
    bias = (bn_beta - bn_mean * bn_gamma * inv_std).reshape(1, C2).astype(jnp.float32)

    flops = 2 * B * R * (2 * Pb + 1) * Wo * (4 * G) * C2
    bytes_accessed = (bands.size * 2 + w_stack.size * 2
                      + (scale.size + bias.size) * 4 + B * Ph * Pw * C2 * 4)

    out = pl.pallas_call(
        _conv_bn_relu_pool_kernel,
        out_shape=jax.ShapeDtypeStruct((B * R, Pb, Pw * C2), x.dtype),
        grid_spec=pltpu.PrefetchScalarGridSpec(
            num_scalar_prefetch=0,
            grid=(B, R),
            in_specs=[
                pl.BlockSpec((None, band, Ws, G),
                             lambda b, r: (b * R + r, 0, 0, 0)),   # input band
                pl.BlockSpec((4, G, C2), lambda b, r: (0, 0, 0)),  # weights (resident)
                pl.BlockSpec((1, C2), lambda b, r: (0, 0)),        # BN scale (resident)
                pl.BlockSpec((1, C2), lambda b, r: (0, 0)),        # BN bias  (resident)
            ],
            out_specs=pl.BlockSpec((None, Pb, Pw * C2),
                                   lambda b, r: (b * R + r, 0, 0)),
        ),
        compiler_params=pltpu.CompilerParams(
            dimension_semantics=("parallel", "parallel"),
            vmem_limit_bytes=32 * 1024 * 1024,
        ),
        cost_estimate=pl.CostEstimate(flops=flops, transcendentals=0,
                                      bytes_accessed=bytes_accessed),
    )(bands, w_stack, scale, bias)

    # back to NCHW to match the PyTorch module's output layout
    return jnp.transpose(out.reshape(B, Ph, Pw, C2), (0, 3, 1, 2))


def conv_maxpool_reference(x, conv_w, gamma, beta, mean, var, eps=1e-5):
    y = jax.lax.conv_general_dilated(
        x, conv_w, window_strides=(2, 2), padding=((1, 1), (1, 1)),
        dimension_numbers=("NCHW", "OIHW", "NCHW"))
    inv_std = jax.lax.rsqrt(var + eps)
    scale = (gamma * inv_std)[None, :, None, None]
    bias = (beta - mean * gamma * inv_std)[None, :, None, None]
    y = jnp.maximum(y * scale + bias, 0.0)
    return jax.lax.reduce_window(
        y, -jnp.inf, jax.lax.max,
        window_dimensions=(1, 1, 3, 3), window_strides=(1, 1, 2, 2),
        padding=((0, 0), (0, 0), (1, 1), (1, 1)))


if __name__ == "__main__":
    key = jax.random.PRNGKey(0)
    k_x, k_w, k_g, k_b, k_m, k_v = jax.random.split(key, 6)

    B, C1, H, W = 2, 4, 16, 16     # small shapes consistent with the module
    C2 = 32

    x = jax.random.normal(k_x, (B, C1, H, W), jnp.float32)
    conv_w = jax.random.normal(k_w, (C2, C1, 3, 3), jnp.float32) * 0.1
    bn_gamma = jax.random.uniform(k_g, (C2,), jnp.float32, 0.5, 1.5)
    bn_beta = jax.random.normal(k_b, (C2,), jnp.float32) * 0.1
    bn_mean = jax.random.normal(k_m, (C2,), jnp.float32) * 0.1
    bn_var = jax.random.uniform(k_v, (C2,), jnp.float32, 0.5, 1.5)

    # pool_rows_per_block=2 -> two row blocks per image, exercising the halo path.
    out = conv_maxpool_pallas(x, conv_w, bn_gamma, bn_beta, bn_mean, bn_var,
                              pool_rows_per_block=2)
    out = jax.block_until_ready(out)

    ref = conv_maxpool_reference(x, conv_w, bn_gamma, bn_beta, bn_mean, bn_var)
    assert out.shape == (B, C2, H // 4, W // 4), out.shape
    max_err = float(jnp.max(jnp.abs(out - ref)))
    # bf16 MXU inputs with f32 accumulation -> slightly relaxed tolerance
    assert jnp.allclose(out, ref, atol=5e-2, rtol=5e-2), max_err

    print("KERNEL_OK")
</pallas_src>

<mosaic_0001>
module attributes {stable_mosaic.version = 11 : i64} {
  func.func @_conv_bn_relu_pool_kernel(%arg0: i32, %arg1: i32, %arg2: memref<1x6x9x16xbf16, #tpu.memory_space<vmem>>, %arg3: memref<4x16x32xbf16, #tpu.memory_space<vmem>>, %arg4: memref<1x32xf32, #tpu.memory_space<vmem>>, %arg5: memref<1x32xf32, #tpu.memory_space<vmem>>, %arg6: memref<1x2x128xf32, #tpu.memory_space<vmem>>) attributes {dimension_semantics = [#tpu.dimension_semantics<parallel>, #tpu.dimension_semantics<parallel>], iteration_bounds = array<i64: 2, 2>, scalar_prefetch = 0 : i64, scratch_operands = 0 : i64, tpu.core_type = #tpu.core_type<tc>, window_params = [{transform_indices = @transform_0, window_bounds = array<i64: 1, 6, 9, 16>}, {pipeline_mode = #tpu.pipeline_mode<synchronous>, transform_indices = @transform_1, window_bounds = array<i64: 4, 16, 32>}, {pipeline_mode = #tpu.pipeline_mode<synchronous>, transform_indices = @transform_2, window_bounds = array<i64: 1, 32>}, {pipeline_mode = #tpu.pipeline_mode<synchronous>, transform_indices = @transform_3, window_bounds = array<i64: 1, 32>}, {transform_indices = @transform_4, window_bounds = array<i64: 1, 2, 128>}]} {
    %c0 = arith.constant 0 : index
    %c0_0 = arith.constant 0 : index
    %c0_1 = arith.constant 0 : index
    %c0_2 = arith.constant 0 : index
    %0 = vector.load %arg2[%c0, %c0_0, %c0_1, %c0_2] : memref<1x6x9x16xbf16, #tpu.memory_space<vmem>>, vector<1x6x9x16xbf16>
    %1 = vector.shape_cast %0 : vector<1x6x9x16xbf16> to vector<6x9x16xbf16>
    %2 = vector.extract_strided_slice %1 {offsets = [0, 0, 0], sizes = [5, 8, 16], strides = [1, 1, 1]} : vector<6x9x16xbf16> to vector<5x8x16xbf16>
    %3 = vector.shape_cast %2 : vector<5x8x16xbf16> to vector<40x16xbf16>
    %c0_3 = arith.constant 0 : index
    %c0_4 = arith.constant 0 : index
    %c0_5 = arith.constant 0 : index
    %4 = vector.load %arg3[%c0_3, %c0_4, %c0_5] : memref<4x16x32xbf16, #tpu.memory_space<vmem>>, vector<1x16x32xbf16>
    %5 = vector.shape_cast %4 : vector<1x16x32xbf16> to vector<16x32xbf16>
    %cst = arith.constant dense<0.000000e+00> : vector<40x32xf32>
    %6 = tpu.matmul %3, %5, %cst {dimension_numbers = #tpu.dot_dimension_numbers<[1], [0], [0], [1], [0, 0, 1, 1], [], []>} : vector<40x16xbf16>, vector<16x32xbf16>, vector<40x32xf32> -> vector<40x32xf32>
    %7 = vector.extract_strided_slice %1 {offsets = [0, 1, 0], sizes = [5, 8, 16], strides = [1, 1, 1]} : vector<6x9x16xbf16> to vector<5x8x16xbf16>
    %8 = vector.shape_cast %7 : vector<5x8x16xbf16> to vector<40x16xbf16>
    %c1 = arith.constant 1 : index
    %c0_6 = arith.constant 0 : index
    %c0_7 = arith.constant 0 : index
    %9 = vector.load %arg3[%c1, %c0_6, %c0_7] : memref<4x16x32xbf16, #tpu.memory_space<vmem>>, vector<1x16x32xbf16>
    %10 = vector.shape_cast %9 : vector<1x16x32xbf16> to vector<16x32xbf16>
    %cst_8 = arith.constant dense<0.000000e+00> : vector<40x32xf32>
    %11 = tpu.matmul %8, %10, %cst_8 {dimension_numbers = #tpu.dot_dimension_numbers<[1], [0], [0], [1], [0, 0, 1, 1], [], []>} : vector<40x16xbf16>, vector<16x32xbf16>, vector<40x32xf32> -> vector<40x32xf32>
    %12 = arith.addf %6, %11 : vector<40x32xf32>
    %13 = vector.extract_strided_slice %1 {offsets = [1, 0, 0], sizes = [5, 8, 16], strides = [1, 1, 1]} : vector<6x9x16xbf16> to vector<5x8x16xbf16>
    %14 = vector.shape_cast %13 : vector<5x8x16xbf16> to vector<40x16xbf16>
    %c2 = arith.constant 2 : index
    %c0_9 = arith.constant 0 : index
    %c0_10 = arith.constant 0 : index
    %15 = vector.load %arg3[%c2, %c0_9, %c0_10] : memref<4x16x32xbf16, #tpu.memory_space<vmem>>, vector<1x16x32xbf16>
    %16 = vector.shape_cast %15 : vector<1x16x32xbf16> to vector<16x32xbf16>
    %cst_11 = arith.constant dense<0.000000e+00> : vector<40x32xf32>
    %17 = tpu.matmul %14, %16, %cst_11 {dimension_numbers = #tpu.dot_dimension_numbers<[1], [0], [0], [1], [0, 0, 1, 1], [], []>} : vector<40x16xbf16>, vector<16x32xbf16>, vector<40x32xf32> -> vector<40x32xf32>
    %18 = arith.addf %12, %17 : vector<40x32xf32>
    %19 = vector.extract_strided_slice %1 {offsets = [1, 1, 0], sizes = [5, 8, 16], strides = [1, 1, 1]} : vector<6x9x16xbf16> to vector<5x8x16xbf16>
    %20 = vector.shape_cast %19 : vector<5x8x16xbf16> to vector<40x16xbf16>
    %c3 = arith.constant 3 : index
    %c0_12 = arith.constant 0 : index
    %c0_13 = arith.constant 0 : index
    %21 = vector.load %arg3[%c3, %c0_12, %c0_13] : memref<4x16x32xbf16, #tpu.memory_space<vmem>>, vector<1x16x32xbf16>
    %22 = vector.shape_cast %21 : vector<1x16x32xbf16> to vector<16x32xbf16>
    %cst_14 = arith.constant dense<0.000000e+00> : vector<40x32xf32>
    %23 = tpu.matmul %20, %22, %cst_14 {dimension_numbers = #tpu.dot_dimension_numbers<[1], [0], [0], [1], [0, 0, 1, 1], [], []>} : vector<40x16xbf16>, vector<16x32xbf16>, vector<40x32xf32> -> vector<40x32xf32>
    %24 = arith.addf %18, %23 : vector<40x32xf32>
    %c0_15 = arith.constant 0 : index
    %c0_16 = arith.constant 0 : index
    %25 = vector.load %arg4[%c0_15, %c0_16] : memref<1x32xf32, #tpu.memory_space<vmem>>, vector<1x32xf32>
    %26 = vector.broadcast %25 : vector<1x32xf32> to vector<40x32xf32>
    %27 = arith.mulf %24, %26 : vector<40x32xf32>
    %c0_17 = arith.constant 0 : index
    %c0_18 = arith.constant 0 : index
    %28 = vector.load %arg5[%c0_17, %c0_18] : memref<1x32xf32, #tpu.memory_space<vmem>>, vector<1x32xf32>
    %29 = vector.broadcast %28 : vector<1x32xf32> to vector<40x32xf32>
    %30 = arith.addf %27, %29 : vector<40x32xf32>
    %cst_19 = arith.constant 0.000000e+00 : f32
    %31 = vector.broadcast %cst_19 : f32 to vector<40x32xf32>
    %32 = arith.maximumf %30, %31 : vector<40x32xf32>
    %33 = tpu.iota {dimensions = array<i32: 0>} : vector<40x1xi32>
    %c0_i32 = arith.constant 0 : i32
    %34 = arith.cmpi eq, %arg1, %c0_i32 : i32
    %c8_i32 = arith.constant 8 : i32
    %35 = vector.broadcast %c8_i32 : i32 to vector<40x1xi32>
    %36 = arith.cmpi slt, %33, %35 : vector<40x1xi32>
    %37 = vector.broadcast %34 : i1 to vector<40x1xi1>
    %38 = arith.andi %37, %36 : vector<40x1xi1>
    %cst_20 = arith.constant 0.000000e+00 : f32
    %39 = vector.shape_cast %38 : vector<40x1xi1> to vector<40x1xi1>
    %40 = vector.broadcast %39 : vector<40x1xi1> to vector<40x32xi1>
    %41 = vector.broadcast %cst_20 : f32 to vector<40x32xf32>
    %42 = arith.select %40, %41, %32 : vector<40x32xi1>, vector<40x32xf32>
    %43 = vector.shape_cast %42 : vector<40x32xf32> to vector<5x8x32xf32>
    %44 = vector.extract_strided_slice %43 {offsets = [0, 0, 0], sizes = [4, 8, 32], strides = [1, 1, 1]} : vector<5x8x32xf32> to vector<4x8x32xf32>
    %45 = vector.shape_cast %44 : vector<4x8x32xf32> to vector<2x2x8x32xf32>
    %46 = vector.extract_strided_slice %43 {offsets = [1, 0, 0], sizes = [4, 8, 32], strides = [1, 1, 1]} : vector<5x8x32xf32> to vector<4x8x32xf32>
    %47 = vector.shape_cast %46 : vector<4x8x32xf32> to vector<2x2x8x32xf32>
    %48 = vector.extract_strided_slice %47 {offsets = [0, 1, 0, 0], sizes = [2, 1, 8, 32], strides = [1, 1, 1, 1]} : vector<2x2x8x32xf32> to vector<2x1x8x32xf32>
    %49 = vector.shape_cast %48 : vector<2x1x8x32xf32> to vector<2x8x32xf32>
    %50 = vector.extract_strided_slice %45 {offsets = [0, 0, 0, 0], sizes = [2, 1, 8, 32], strides = [1, 1, 1, 1]} : vector<2x2x8x32xf32> to vector<2x1x8x32xf32>
    %51 = vector.shape_cast %50 : vector<2x1x8x32xf32> to vector<2x8x32xf32>
    %52 = vector.extract_strided_slice %45 {offsets = [0, 1, 0, 0], sizes = [2, 1, 8, 32], strides = [1, 1, 1, 1]} : vector<2x2x8x32xf32> to vector<2x1x8x32xf32>
    %53 = vector.shape_cast %52 : vector<2x1x8x32xf32> to vector<2x8x32xf32>
    %54 = arith.maximumf %51, %53 : vector<2x8x32xf32>
    %55 = arith.maximumf %54, %49 : vector<2x8x32xf32>
    %56 = vector.shape_cast %55 : vector<2x8x32xf32> to vector<2x4x2x32xf32>
    %57 = vector.extract_strided_slice %56 {offsets = [0, 0, 0, 0], sizes = [2, 4, 1, 32], strides = [1, 1, 1, 1]} : vector<2x4x2x32xf32> to vector<2x4x1x32xf32>
    %58 = vector.shape_cast %57 : vector<2x4x1x32xf32> to vector<2x4x32xf32>
    %59 = vector.extract_strided_slice %56 {offsets = [0, 0, 1, 0], sizes = [2, 4, 1, 32], strides = [1, 1, 1, 1]} : vector<2x4x2x32xf32> to vector<2x4x1x32xf32>
    %60 = vector.shape_cast %59 : vector<2x4x1x32xf32> to vector<2x4x32xf32>
    %cst_21 = arith.constant 0.000000e+00 : f32
    %61 = vector.broadcast %cst_21 : f32 to vector<2x1x32xf32>
    %62 = vector.extract_strided_slice %60 {offsets = [0, 0, 0], sizes = [2, 3, 32], strides = [1, 1, 1]} : vector<2x4x32xf32> to vector<2x3x32xf32>
    %63 = tpu.concatenate %61, %62 in 1 : vector<2x1x32xf32>, vector<2x3x32xf32> -> vector<2x4x32xf32>
    %64 = arith.maximumf %58, %60 : vector<2x4x32xf32>
    %65 = arith.maximumf %64, %63 : vector<2x4x32xf32>
    %66 = vector.shape_cast %65 : vector<2x4x32xf32> to vector<2x128xf32>
    %c0_22 = arith.constant 0 : index
    %c0_23 = arith.constant 0 : index
    %c0_24 = arith.constant 0 : index
    %67 = vector.load %arg6[%c0_22, %c0_23, %c0_24] : memref<1x2x128xf32, #tpu.memory_space<vmem>>, vector<1x2x128xf32>
    %68 = vector.shape_cast %67 : vector<1x2x128xf32> to vector<2x128xf32>
    %69 = vector.shape_cast %66 : vector<2x128xf32> to vector<1x2x128xf32>
    tpu.vector_store %arg6[%c0_22, %c0_23, %c0_24], %69 {strides = array<i32>} : memref<1x2x128xf32, #tpu.memory_space<vmem>>, vector<1x2x128xf32>,
    return
  }
  func.func @transform_0(%arg0: i32, %arg1: i32) -> (i32, i32, i32, i32) {
    %c2_i32 = arith.constant 2 : i32
    %0 = arith.muli %arg0, %c2_i32 : i32
    %1 = arith.addi %0, %arg1 : i32
    %c0_i32 = arith.constant 0 : i32
    %c0_i32_0 = arith.constant 0 : i32
    %c0_i32_1 = arith.constant 0 : i32
    %c0_i32_2 = arith.constant 0 : i32
    return %1, %c0_i32, %c0_i32_0, %c0_i32_1 : i32, i32, i32, i32
  }
  func.func @transform_1(%arg0: i32, %arg1: i32) -> (i32, i32, i32) {
    %c0_i32 = arith.constant 0 : i32
    %c0_i32_0 = arith.constant 0 : i32
    %c0_i32_1 = arith.constant 0 : i32
    %c0_i32_2 = arith.constant 0 : i32
    return %c0_i32, %c0_i32_0, %c0_i32_1 : i32, i32, i32
  }
  func.func @transform_2(%arg0: i32, %arg1: i32) -> (i32, i32) {
    %c0_i32 = arith.constant 0 : i32
    %c0_i32_0 = arith.constant 0 : i32
    %c0_i32_1 = arith.constant 0 : i32
    return %c0_i32, %c0_i32_0 : i32, i32
  }
  func.func @transform_3(%arg0: i32, %arg1: i32) -> (i32, i32) {
    %c0_i32 = arith.constant 0 : i32
    %c0_i32_0 = arith.constant 0 : i32
    %c0_i32_1 = arith.constant 0 : i32
    return %c0_i32, %c0_i32_0 : i32, i32
  }
  func.func @transform_4(%arg0: i32, %arg1: i32) -> (i32, i32, i32) {
    %c2_i32 = arith.constant 2 : i32
    %0 = arith.muli %arg0, %c2_i32 : i32
    %1 = arith.addi %0, %arg1 : i32
    %c0_i32 = arith.constant 0 : i32
    %c0_i32_0 = arith.constant 0 : i32
    %c0_i32_1 = arith.constant 0 : i32
    return %1, %c0_i32, %c0_i32_0 : i32, i32, i32
  }
}

</mosaic_0001>

<llo_original>
// kernel: conv_maxpool_pallas.1
$region0: #{conv_maxpool_pallas.1}
  #allocation0 [shape = 'u32[]', space=smem, size = 0x4, offset = 0x4, fixed_abs, tag = 'smem constant byte address 0x4 - core index']
  #allocation1 [shape = 'u32[72,128]{1,0:T(1,128)}', space=vmem, size = 0x9000, scoped, tag = 'internal scratch']
  %s0 = inlined_call_operand.vmem [shape: bf16[4,6,9,16], index: 0, kind: input, shape index: {}]
  %s1 = inlined_call_operand.vmem [shape: bf16[4,16,32], index: 1, kind: input, shape index: {}]
  %s2 = inlined_call_operand.vmem [shape: f32[1,32], index: 2, kind: input, shape index: {}]
  %s3 = inlined_call_operand.vmem [shape: f32[1,32], index: 3, kind: input, shape index: {}]
  %s4 = inlined_call_operand.vmem [shape: f32[4,2,128], index: 4, kind: output, shape index: {}]
  %s5 = sld [smem:[#allocation0]]
  $region49: #{conv_maxpool_pallas.1} parent=0
    _
  %s7 = ssub.s32 1, %s5
  %s8 = scalar_select 0, %s7, %s5
  loop: start=0, step=1, limit=6
  $region2: #{conv_maxpool_pallas.1} parent=0 // loop_pre_header
    _
  $region3: #{conv_maxpool_pallas.1} parent=0 // loop_header
    %s10 = sphi 0, %s14
    %p11 = scmp.ge.s32.totalorder %s10, 6
    %s17 = sphi 0, %s29
    %s18 = sphi 0, %s25
    %s19 = sphi 0, %s17
    %s20 = sphi 0, %s18
    %s21 = sphi 0, %s19
    %s22 = sphi 0, %s20
    %s36 = sphi 0, %s38
    %s39 = sphi 0, %s36
    %s40 = sphi 0, %s39
    %s56 = sphi 0, %s40
    %s60 = sphi 0, %s60
    %s62 = sphi 0, %s60
    %s63 = sphi 0, %s62
    %s77 = sphi 0, %s63
    %s81 = sphi 0, %s81
    %s83 = sphi 0, %s81
    %s84 = sphi 0, %s83
    %s98 = sphi 0, %s84
    %s102 = sphi 0, %s102
    %s104 = sphi 0, %s102
    %s105 = sphi 0, %s104
    %s119 = sphi 0, %s105
    %s129 = sphi 0, %s131
    %s132 = sphi 0, %s129
    %s133 = sphi 0, %s132
    %s149 = sphi 0, %s133
  $region4: #{conv_maxpool_pallas.1} parent=0 // loop_header_branch
    %13 = sbr.rel (%p11) target = $region8
  $region5: #{conv_maxpool_pallas.1} parent=0 // loop_body
    %s15 = ssub.s32 %s10, 1
    %s16 = ssub.s32 %s10, 2
    %s23 = sadd.s32 1, %s18
    %p24 = scmp.ge.s32.totalorder %s23, 2
    %s25 = scalar_select %p24, 0, %s23
    %s26 = sadd.s32 1, %s17
    %s27 = scalar_select %p24, %s26, %s17
    %p28 = scmp.ge.s32.totalorder %s27, 2
    %s29 = scalar_select %p28, 0, %s27
    %s30 = smul.u32 %s17, 2
    %s31 = sadd.s32 %s30, %s18
    %s32 = smul.u32 %s29, 2
    %s33 = sadd.s32 %s32, %s25
    %s34 = ssub.s32 %s31, %s33
    %p35 = scmp.eq.s32.totalorder %s34, 0
    %s37 = sadd.s32 %s36, 1
    %s38 = scalar_select %p35, %s36, %s37
    %p41 = pneg %p35
    %p42 = scmp.eq.s32.totalorder %s10, 3
    %p43 = por %p41, %p42
    %p44 = scmp.ne.s32.totalorder %s36, %s39
    %p45 = scmp.eq.s32.totalorder %s10, 0
    %p46 = por %p44, %p45
    %p47 = scmp.ne.s32.totalorder %s36, %s39
    %p48 = scmp.eq.s32.totalorder %s15, 3
    %p49 = por %p47, %p48
    %p50 = scmp.ne.s32.totalorder %s39, %s40
    %p51 = scmp.eq.s32.totalorder %s15, 0
    %p52 = por %p50, %p51
    %p53 = scmp.ne.s32.totalorder %s39, %s40
    %p54 = scmp.eq.s32.totalorder %s16, 3
    %p55 = por %p53, %p54
    %p57 = scmp.ne.s32.totalorder %s40, %s56
    %p58 = scmp.eq.s32.totalorder %s16, 0
    %p59 = por %p57, %p58
    %s61 = sadd.s32 %s60, 1
    %p64 = scmp.eq.s32.totalorder %s10, 3
    %p65 = scmp.ne.s32.totalorder %s60, %s62
    %p66 = scmp.eq.s32.totalorder %s10, 0
    %p67 = por %p65, %p66
    %p68 = scmp.ne.s32.totalorder %s60, %s62
    %p69 = scmp.eq.s32.totalorder %s15, 3
    %p70 = por %p68, %p69
    %p71 = scmp.ne.s32.totalorder %s62, %s63
    %p72 = scmp.eq.s32.totalorder %s15, 0
    %p73 = por %p71, %p72
    %p74 = scmp.ne.s32.totalorder %s62, %s63
    %p75 = scmp.eq.s32.totalorder %s16, 3
    %p76 = por %p74, %p75
    %p78 = scmp.ne.s32.totalorder %s63, %s77
    %p79 = scmp.eq.s32.totalorder %s16, 0
    %p80 = por %p78, %p79
    %s82 = sadd.s32 %s81, 1
    %p85 = scmp.eq.s32.totalorder %s10, 3
    %p86 = scmp.ne.s32.totalorder %s81, %s83
    %p87 = scmp.eq.s32.totalorder %s10, 0
    %p88 = por %p86, %p87
    %p89 = scmp.ne.s32.totalorder %s81, %s83
    %p90 = scmp.eq.s32.totalorder %s15, 3
    %p91 = por %p89, %p90
    %p92 = scmp.ne.s32.totalorder %s83, %s84
    %p93 = scmp.eq.s32.totalorder %s15, 0
    %p94 = por %p92, %p93
    %p95 = scmp.ne.s32.totalorder %s83, %s84
    %p96 = scmp.eq.s32.totalorder %s16, 3
    %p97 = por %p95, %p96
    %p99 = scmp.ne.s32.totalorder %s84, %s98
    %p100 = scmp.eq.s32.totalorder %s16, 0
    %p101 = por %p99, %p100
    %s103 = sadd.s32 %s102, 1
    %p106 = scmp.eq.s32.totalorder %s10, 3
    %p107 = scmp.ne.s32.totalorder %s102, %s104
    %p108 = scmp.eq.s32.totalorder %s10, 0
    %p109 = por %p107, %p108
    %p110 = scmp.ne.s32.totalorder %s102, %s104
    %p111 = scmp.eq.s32.totalorder %s15, 3
    %p112 = por %p110, %p111
    %p113 = scmp.ne.s32.totalorder %s104, %s105
    %p114 = scmp.eq.s32.totalorder %s15, 0
    %p115 = por %p113, %p114
    %p116 = scmp.ne.s32.totalorder %s104, %s105
    %p117 = scmp.eq.s32.totalorder %s16, 3
    %p118 = por %p116, %p117
    %p120 = scmp.ne.s32.totalorder %s105, %s119
    %p121 = scmp.eq.s32.totalorder %s16, 0
    %p122 = por %p120, %p121
    %s123 = smul.u32 %s17, 2
    %s124 = sadd.s32 %s123, %s18
    %s125 = smul.u32 %s29, 2
    %s126 = sadd.s32 %s125, %s25
    %s127 = ssub.s32 %s124, %s126
    %p128 = scmp.eq.s32.totalorder %s127, 0
    %s130 = sadd.s32 %s129, 1
    %s131 = scalar_select %p128, %s129, %s130
    %p134 = pneg %p128
    %p135 = scmp.eq.s32.totalorder %s10, 3
    %p136 = por %p134, %p135
    %p137 = scmp.ne.s32.totalorder %s129, %s132
    %p138 = scmp.eq.s32.totalorder %s10, 0
    %p139 = por %p137, %p138
    %p140 = scmp.ne.s32.totalorder %s129, %s132
    %p141 = scmp.eq.s32.totalorder %s15, 3
    %p142 = por %p140, %p141
    %p143 = scmp.ne.s32.totalorder %s132, %s133
    %p144 = scmp.eq.s32.totalorder %s15, 0
    %p145 = por %p143, %p144
    %p146 = scmp.ne.s32.totalorder %s132, %s133
    %p147 = scmp.eq.s32.totalorder %s16, 3
    %p148 = por %p146, %p147
    %p150 = scmp.ne.s32.totalorder %s133, %s149
    %p151 = scmp.eq.s32.totalorder %s16, 0
    %p152 = por %p150, %p151
    %p153 = scmp.le.s32.totalorder 1, %s10
    %p154 = scmp.lt.s32.totalorder %s10, 5
    %p155 = pnand %p153, %p154
    %p156 = pneg %p155
    // Predicated region
    $region9: #{conv_maxpool_pallas.1} parent=5 // pred_check
      _
    $region10: #{conv_maxpool_pallas.1} parent=5 // pred_check_branch
      %158 = sbr.rel (%p155) target = $region12
    $region11: #{conv_maxpool_pallas.1} parent=5 // pred_region
      %s159 = ssub.s32 %s10, 1
      // Predicated region
      $region13: #{conv_maxpool_pallas.1} parent=11 // pred_check
        %p160 = pneg %p73
      $region14: #{conv_maxpool_pallas.1} parent=11 // pred_check_branch
        %162 = sbr.rel (%p160) target = $region16
      $region15: #{conv_maxpool_pallas.1} parent=11 // pred_region
        _
      $region16: #{conv_maxpool_pallas.1} parent=11 // pred_fallthru
        _
      // Predicated region
      $region17: #{conv_maxpool_pallas.1} parent=11 // pred_check
        %p163 = pneg %p94
      $region18: #{conv_maxpool_pallas.1} parent=11 // pred_check_branch
        %165 = sbr.rel (%p163) target = $region20
      $region19: #{conv_maxpool_pallas.1} parent=11 // pred_region
        _
      $region20: #{conv_maxpool_pallas.1} parent=11 // pred_fallthru
        _
      // Predicated region
      $region21: #{conv_maxpool_pallas.1} parent=11 // pred_check
        %p166 = pneg %p115
      $region22: #{conv_maxpool_pallas.1} parent=11 // pred_check_branch
        %168 = sbr.rel (%p166) target = $region24
      $region23: #{conv_maxpool_pallas.1} parent=11 // pred_region
        _
      $region24: #{conv_maxpool_pallas.1} parent=11 // pred_fallthru
        _
    $region12: #{conv_maxpool_pallas.1} parent=5 // pred_fallthru
      _
    %p169 = scmp.lt.s32.totalorder %s10, 4
    // Predicated region
    $region25: #{conv_maxpool_pallas.1} parent=5 // pred_check
      %p170 = pneg %p169
    $region26: #{conv_maxpool_pallas.1} parent=5 // pred_check_branch
      %172 = sbr.rel (%p170) target = $region28
    $region27: #{conv_maxpool_pallas.1} parent=5 // pred_region
      // Predicated region
      $region29: #{conv_maxpool_pallas.1} parent=27 // pred_check
        %p173 = pneg %p46
      $region30: #{conv_maxpool_pallas.1} parent=27 // pred_check_branch
        %175 = sbr.rel (%p173) target = $region32
      $region31: #{conv_maxpool_pallas.1} parent=27 // pred_region
        %s176 = smul.u32 %s17, 2
        %s177 = sadd.s32 %s176, %s18
        %p178 = scmp.lt.s32.totalorder %s177, 3
        %s179 = scalar_select %p178, %s177, 3
        %s180 = smul.addr %s179, 12
        %s181 = smul.addr %s180, 4
        %s182 = scalar_lea.vmem %s0, %s181
        %s183 = smul.u32 %s17, 2
        %s184 = sadd.s32 %s183, %s18
      $region32: #{conv_maxpool_pallas.1} parent=27 // pred_fallthru
        _
    $region28: #{conv_maxpool_pallas.1} parent=5 // pred_fallthru
      _
    %p185 = scmp.le.s32.totalorder 1, %s10
    %p186 = scmp.lt.s32.totalorder %s10, 5
    %p187 = pnand %p185, %p186
    %p188 = pneg %p187
    // Predicated region
    $region33: #{conv_maxpool_pallas.1} parent=5 // pred_check
      _
    $region34: #{conv_maxpool_pallas.1} parent=5 // pred_check_branch
      %190 = sbr.rel (%p187) target = $region36
    $region35: #{conv_maxpool_pallas.1} parent=5 // pred_region
      %s191 = ssub.s32 %s10, 1
      %s192 = smul.u32 %s19, 2
      %s193 = sadd.s32 %s192, %s20
      %p194 = scmp.lt.s32.totalorder %s193, 3
      %s195 = scalar_select %p194, %s193, 3
      %s196 = smul.addr %s195, 12
      %s197 = smul.addr %s196, 4
      %s198 = scalar_lea.vmem %s0, %s197
      %p199 = pneg %p52
      %p200 = pneg %p49
      %p201 = pneg %p73
      %p202 = pneg %p70
      %p203 = pneg %p94
      %p204 = pneg %p91
      %p205 = pneg %p115
      %p206 = pneg %p112
      %p207 = pneg %p145
      %p208 = pneg %p142
      %s209 = smul.u32 %s19, 2
      %s210 = sadd.s32 %s209, %s20
      %p211 = scmp.lt.s32.totalorder %s210, 3
      %s212 = scalar_select %p211, %s210, 3
      %s213 = smul.addr %s212, 2
      %s214 = scalar_lea.vmem %s4, %s213
      %s215 = smul.u32 %s19, 2
      %s216 = sadd.s32 %s215, %s20
      %p217 = scmp.lt.s32.totalorder %s216, 3
      %s218 = scalar_select %p217, %s216, 3
      %s219 = smul.addr %s218, 12
      %s220 = smul.addr %s219, 4
      %s221 = scalar_lea.vmem %s0, %s220
      %s222 = smul.u32 %s19, 2
      %s223 = sadd.s32 %s222, %s20
      %s224 = smul.u32 %s19, 2
      %s225 = sadd.s32 %s224, %s20
      %p226 = scmp.lt.s32.totalorder %s225, 3
      %s227 = scalar_select %p226, %s225, 3
      %s228 = smul.addr %s227, 2
      %s229 = scalar_lea.vmem %s4, %s228
      %s230 = smul.u32 %s19, 2
      %s231 = sadd.s32 %s230, %s20
      %v233 = vld [vmem:[%s221] sm:$0xf]
      %v234 = vld [vmem:[%s221 + $0x4] sm:$0x1]
      %v235 = vld [vmem:[%s221 + $0x8] sm:$0xf]
      %v236 = vld [vmem:[%s221 + $0xc] sm:$0x1]
      %v237 = vld [vmem:[%s221 + $0x10] sm:$0xf]
      %v238 = vld [vmem:[%s221 + $0x14] sm:$0x1]
      %v239 = vld [vmem:[%s221 + $0x18] sm:$0xf]
      %v240 = vld [vmem:[%s221 + $0x1c] sm:$0x1]
      %v241 = vld [vmem:[%s221 + $0x20] sm:$0xf]
      %v242 = vld [vmem:[%s221 + $0x24] sm:$0x1]
      %v243 = vld [vmem:[%s221 + $0x28] sm:$0xf]
      %v244 = vld [vmem:[%s221 + $0x2c] sm:$0x1]
      %v245 = vld [vmem:[%s1] sm:$0xf]
      %v246 = vld [vmem:[%s1 + $0x4] sm:$0xf]
      %vm247 = vsmask.f32 3328
      %vm248 = vsmask.f32 7440
      %vm249 = vmor %vm247, %vm248
      %v251 = vshrl.u32 %v233, 16
      %v253 = vrot.slane %v251, 4
      %v254 = vshll.u32 %v233, 16
      %v256 = vrot.slane %v254, 5
      %v257 = vor.u32 %v253, %v256
      %v258 = vrot.slane %v257, 4
      %v260 = vshll.u32 %v234, 16
      %v262 = vrot.slane %v260, 5
      %v263 = vsel %vm249, %v258, %v262
      %v265 = vshrl.u32 %v235, 16
      %v267 = vrot.slane %v265, 4
      %v268 = vshll.u32 %v235, 16
      %v270 = vrot.slane %v268, 5
      %v271 = vor.u32 %v267, %v270
      %v272 = vrot.slane %v271, 4
      %v274 = vshll.u32 %v236, 16
      %v276 = vrot.slane %v274, 5
      %v277 = vsel %vm249, %v272, %v276
      %v279 = vshrl.u32 %v237, 16
      %v281 = vrot.slane %v279, 4
      %v282 = vshll.u32 %v237, 16
      %v284 = vrot.slane %v282, 5
      %v285 = vor.u32 %v281, %v284
      %v286 = vrot.slane %v285, 4
      %v288 = vshll.u32 %v238, 16
      %v290 = vrot.slane %v288, 5
      %v291 = vsel %vm249, %v286, %v290
      %v293 = vshrl.u32 %v239, 16
      %v295 = vrot.slane %v293, 4
      %v296 = vshll.u32 %v239, 16
      %v298 = vrot.slane %v296, 5
      %v299 = vor.u32 %v295, %v298
      %v300 = vrot.slane %v299, 4
      %v302 = vshll.u32 %v240, 16
      %v304 = vrot.slane %v302, 5
      %v305 = vsel %vm249, %v300, %v304
      %v307 = vshrl.u32 %v241, 16
      %v309 = vrot.slane %v307, 4
      %v310 = vshll.u32 %v241, 16
      %v312 = vrot.slane %v310, 5
      %v313 = vor.u32 %v309, %v312
      %v314 = vrot.slane %v313, 4
      %v316 = vshll.u32 %v242, 16
      %v318 = vrot.slane %v316, 5
      %v319 = vsel %vm249, %v314, %v318
      %s320 = scalar_lea.vmem %s1, 8
      %v321 = vld [vmem:[%s320] sm:$0xf]
      %v322 = vld [vmem:[%s320 + $0x4] sm:$0xf]
      %v323 = vunpack.c.l.b16 %v263
      %v324 = vunpack.c.l.b16 %v277
      %v325 = vunpack.c.l.b16 %v291
      %v326 = vunpack.c.l.b16 %v305
      %v327 = vunpack.c.l.b16 %v319
      %v328 = vpack.c.b16 %v324, %v323
      %v329 = vpack.c.b16 %v326, %v325
      %v330 = vpack.c.b16 %v327, %v327
      %v333 = vunpack.c.l.b16 %v321
      %v334 = vunpack.c.l.b16 %v322
      %v335 = vpack.c.b16 %v334, %v333
      %vm337 = vcmask 130048
      %v339 = vsel %vm337, %v328, 0
      %v342 = vsel %vm337, %v329, 0
      %v345 = vsel %vm337, %v330, 0
      %347 = vmatpush.bf16.msra.mxu0 0
      %348 = vmatpush.bf16.msra.mxu0 0
      %349 = vmatpush.bf16.msra.mxu0 0
      %350 = vmatpush.bf16.msra.mxu0 0
      %351 = vmatpush.bf16.msra.mxu0 0
      %352 = vmatpush.bf16.msra.mxu0 0
      %353 = vmatpush.bf16.msra.mxu0 0
      %354 = vmatpush.bf16.msra.mxu0 %v335
      %355 = vmatmul.bf16.gmra.mxu0 %v339
      %v356 = vpop.f32.mrf.mxu0
      %v357 = vadd.f32 0.0, %v356
      %v358 = vpop.f32.mrf.mxu0
      %v359 = vadd.f32 0.0, %v358
      %360 = vmatmul.bf16.gmra.mxu0 %v342
      %v361 = vpop.f32.mrf.mxu0
      %v362 = vadd.f32 0.0, %v361
      %v363 = vpop.f32.mrf.mxu0
      %v364 = vadd.f32 0.0, %v363
      %365 = vmatmul.bf16.gmra.mxu0 %v345
      %v366 = vpop.f32.mrf.mxu0
      %v367 = vadd.f32 0.0, %v366
      %v368 = vpop.f32.mrf.mxu0
      %369 = vdwg.mxu0
      %v375 = vunpack.c.l.b16 %v233
      %v376 = vunpack.c.l.b16 %v235
      %v377 = vunpack.c.l.b16 %v237
      %v378 = vunpack.c.l.b16 %v239
      %v379 = vunpack.c.l.b16 %v241
      %v380 = vpack.c.b16 %v376, %v375
      %v381 = vpack.c.b16 %v378, %v377
      %v382 = vpack.c.b16 %v379, %v379
      %v385 = vunpack.c.l.b16 %v245
      %v386 = vunpack.c.l.b16 %v246
      %v387 = vpack.c.b16 %v386, %v385
      %v390 = vsel %vm337, %v380, 0
      %v393 = vsel %vm337, %v381, 0
      %v396 = vsel %vm337, %v382, 0
      %398 = vmatpush.bf16.msra.mxu0 0
      %399 = vmatpush.bf16.msra.mxu0 0
      %400 = vmatpush.bf16.msra.mxu0 0
      %401 = vmatpush.bf16.msra.mxu0 0
      %402 = vmatpush.bf16.msra.mxu0 0
      %403 = vmatpush.bf16.msra.mxu0 0
      %404 = vmatpush.bf16.msra.mxu0 0
      %405 = vmatpush.bf16.msra.mxu0 %v387
      %406 = vmatmul.bf16.gmra.mxu0 %v390
      %v407 = vpop.f32.mrf.mxu0
      %v408 = vadd.f32 %v357, %v407
      %v409 = vpop.f32.mrf.mxu0
      %v410 = vadd.f32 %v359, %v409
      %411 = vmatmul.bf16.gmra.mxu0 %v393
      %v412 = vpop.f32.mrf.mxu0
      %v413 = vadd.f32 %v362, %v412
      %v414 = vpop.f32.mrf.mxu0
      %v415 = vadd.f32 %v364, %v414
      %416 = vmatmul.bf16.gmra.mxu0 %v396
      %v417 = vpop.f32.mrf.mxu0
      %v418 = vadd.f32 %v367, %v417
      %v419 = vpop.f32.mrf.mxu0
      %420 = vdwg.mxu0
      %s421 = scalar_lea.vmem %s1, 16
      %v422 = vld [vmem:[%s421] sm:$0xf]
      %v423 = vld [vmem:[%s421 + $0x4] sm:$0xf]
      %v425 = vunpack.c.l.b16 %v243
      %v426 = vpack.c.b16 %v377, %v376
      %v427 = vpack.c.b16 %v379, %v378
      %v428 = vpack.c.b16 %v425, %v425
      %v431 = vunpack.c.l.b16 %v422
      %v432 = vunpack.c.l.b16 %v423
      %v433 = vpack.c.b16 %v432, %v431
      %v436 = vsel %vm337, %v426, 0
      %v439 = vsel %vm337, %v427, 0
      %v442 = vsel %vm337, %v428, 0
      %444 = vmatpush.bf16.msra.mxu0 0
      %445 = vmatpush.bf16.msra.mxu0 0
      %446 = vmatpush.bf16.msra.mxu0 0
      %447 = vmatpush.bf16.msra.mxu0 0
      %448 = vmatpush.bf16.msra.mxu0 0
      %449 = vmatpush.bf16.msra.mxu0 0
      %450 = vmatpush.bf16.msra.mxu0 0
      %451 = vmatpush.bf16.msra.mxu0 %v433
      %452 = vmatmul.bf16.gmra.mxu0 %v436
      %v453 = vpop.f32.mrf.mxu0
      %v454 = vadd.f32 0.0, %v453
      %v455 = vpop.f32.mrf.mxu0
      %v456 = vadd.f32 0.0, %v455
      %457 = vmatmul.bf16.gmra.mxu0 %v439
      %v458 = vpop.f32.mrf.mxu0
      %v459 = vadd.f32 0.0, %v458
      %v460 = vpop.f32.mrf.mxu0
      %v461 = vadd.f32 0.0, %v460
      %462 = vmatmul.bf16.gmra.mxu0 %v442
      %v463 = vpop.f32.mrf.mxu0
      %v464 = vadd.f32 0.0, %v463
      %v465 = vpop.f32.mrf.mxu0
      %466 = vdwg.mxu0
      %v467 = vadd.f32 %v408, %v454
      %v468 = vadd.f32 %v410, %v456
      %v469 = vadd.f32 %v413, %v459
      %v470 = vadd.f32 %v415, %v461
      %v471 = vadd.f32 %v418, %v464
      %v473 = vshrl.u32 %v243, 16
      %v475 = vrot.slane %v473, 4
      %v476 = vshll.u32 %v243, 16
      %v478 = vrot.slane %v476, 5
      %v479 = vor.u32 %v475, %v478
      %v480 = vrot.slane %v479, 4
      %v482 = vshll.u32 %v244, 16
      %v484 = vrot.slane %v482, 5
      %v485 = vsel %vm249, %v480, %v484
      %s486 = scalar_lea.vmem %s1, 24
      %v487 = vld [vmem:[%s486] sm:$0xf]
      %v488 = vld [vmem:[%s486 + $0x4] sm:$0xf]
      %v489 = vunpack.c.l.b16 %v485
      %v490 = vpack.c.b16 %v325, %v324
      %v491 = vpack.c.b16 %v327, %v326
      %v492 = vpack.c.b16 %v489, %v489
      %v495 = vunpack.c.l.b16 %v487
      %v496 = vunpack.c.l.b16 %v488
      %v497 = vpack.c.b16 %v496, %v495
      %v500 = vsel %vm337, %v490, 0
      %v503 = vsel %vm337, %v491, 0
      %v506 = vsel %vm337, %v492, 0
      %508 = vmatpush.bf16.msra.mxu0 0
      %509 = vmatpush.bf16.msra.mxu0 0
      %510 = vmatpush.bf16.msra.mxu0 0
      %511 = vmatpush.bf16.msra.mxu0 0
      %512 = vmatpush.bf16.msra.mxu0 0
      %513 = vmatpush.bf16.msra.mxu0 0
      %514 = vmatpush.bf16.msra.mxu0 0
      %515 = vmatpush.bf16.msra.mxu0 %v497
      %516 = vmatmul.bf16.gmra.mxu0 %v500
      %v517 = vpop.f32.mrf.mxu0
      %v518 = vadd.f32 0.0, %v517
      %v519 = vpop.f32.mrf.mxu0
      %v520 = vadd.f32 0.0, %v519
      %521 = vmatmul.bf16.gmra.mxu0 %v503
      %v522 = vpop.f32.mrf.mxu0
      %v523 = vadd.f32 0.0, %v522
      %v524 = vpop.f32.mrf.mxu0
      %v525 = vadd.f32 0.0, %v524
      %526 = vmatmul.bf16.gmra.mxu0 %v506
      %v527 = vpop.f32.mrf.mxu0
      %v528 = vadd.f32 0.0, %v527
      %v529 = vpop.f32.mrf.mxu0
      %530 = vdwg.mxu0
      %v531 = vadd.f32 %v467, %v518
      %v532 = vadd.f32 %v468, %v520
      %v533 = vadd.f32 %v469, %v523
      %v534 = vadd.f32 %v470, %v525
      %v535 = vadd.f32 %v471, %v528
      %v536 = vld [vmem:[%s2] sm:$0x1]
      %v538 = vperm.slane %v536, 0
      %v540 = vmul.f32 %v531, %v538
      %v541 = vmul.f32 %v532, %v538
      %v542 = vmul.f32 %v533, %v538
      %v543 = vmul.f32 %v534, %v538
      %v544 = vmul.f32 %v535, %v538
      %v545 = vld [vmem:[%s3] sm:$0x1]
      %v547 = vperm.slane %v545, 0
      %v549 = vadd.f32 %v540, %v547
      %v550 = vadd.f32 %v541, %v547
      %v551 = vadd.f32 %v542, %v547
      %v552 = vadd.f32 %v543, %v547
      %v553 = vadd.f32 %v544, %v547
      %v554 = vmax.f32 %v549, 0.0
      %v555 = vmax.f32 %v550, 0.0
      %v556 = vmax.f32 %v551, 0.0
      %v557 = vmax.f32 %v552, 0.0
      %v558 = vmax.f32 %v553, 0.0
      %v559 = vlaneseq
      %v560 = vshrl.u32 %v559, 7
      %v561 = vadd.s32 %v560, 8
      %v562 = vadd.s32 %v560, 16
      %v563 = vadd.s32 %v560, 24
      %v564 = vadd.s32 %v560, 32
      %p565 = scmp.eq.s32.totalorder %s20, 0
      %vm566 = vcmp.lt.s32.totalorder %v560, 8
      %vm567 = vcmp.lt.s32.totalorder %v561, 8
      %vm568 = vcmp.lt.s32.totalorder %v562, 8
      %vm569 = vcmp.lt.s32.totalorder %v563, 8
      %vm570 = vcmp.lt.s32.totalorder %v564, 8
      %s571 = scalar_select %p565, 1, 0
      %v572 = vstv %s571
      %vm573 = vcmp.eq.s32.totalorder %v572, 1
      %vm574 = vmand %vm573, %vm566
      %vm575 = vmand %vm573, %vm567
      %vm576 = vmand %vm573, %vm568
      %vm577 = vmand %vm573, %vm569
      %vm578 = vmand %vm573, %vm570
      %v579 = vsel %vm574, 1, 0
      %v580 = vsel %vm575, 1, 0
      %v581 = vsel %vm576, 1, 0
      %v582 = vsel %vm577, 1, 0
      %v583 = vsel %vm578, 1, 0
      %vm584 = vcmp.eq.s32.totalorder %v579, 1
      %vm585 = vcmp.eq.s32.totalorder %v580, 1
      %vm586 = vcmp.eq.s32.totalorder %v581, 1
      %vm587 = vcmp.eq.s32.totalorder %v582, 1
      %vm588 = vcmp.eq.s32.totalorder %v583, 1
      %v589 = vsel %vm584, 0.0, %v554
      %v590 = vsel %vm585, 0.0, %v555
      %v591 = vsel %vm586, 0.0, %v556
      %v592 = vsel %vm587, 0.0, %v557
      %v593 = vsel %vm588, 0.0, %v558
      %v594 = vmax.f32 %v589, %v590
      %v595 = vmax.f32 %v591, %v592
      %v596 = vmax.f32 %v594, %v591
      %v597 = vmax.f32 %v595, %v593
      %v600 = vrot.slane %v596, 2
      %v601 = vrot.slane %v596, 4
      %v602 = vrot.slane %v596, 6
      %v603 = vrot.slane %v597, 2
      %v604 = vrot.slane %v597, 4
      %v605 = vrot.slane %v597, 6
      %v612 = vperm.slane %v596, 1
      %v613 = vperm.slane %v600, 1
      %v614 = vperm.slane %v601, 1
      %v615 = vperm.slane %v597, 1
      %v616 = vperm.slane %v603, 1
      %v617 = vperm.slane %v604, 1
      %vm618 = vcmask 1042434
      %v619 = vsel %vm618, %v613, %v612
      %vm620 = vcmask 1043459
      %v621 = vsel %vm620, %v614, %v619
      %v622 = vsel %vm618, %v616, %v615
      %v623 = vsel %vm620, %v617, %v622
      %vm626 = vcmask 1040384
      %v627 = vsel %vm626, 0.0, %v621
      %v628 = vsel %vm626, 0.0, %v623
      %v629 = vrot.slane %v596, 7
      %v630 = vrot.slane %v629, 2
      %v631 = vrot.slane %v600, 7
      %v632 = vrot.slane %v631, 2
      %v633 = vrot.slane %v601, 7
      %v634 = vrot.slane %v633, 2
      %v635 = vrot.slane %v602, 7
      %v636 = vrot.slane %v635, 2
      %v637 = vrot.slane %v597, 7
      %v638 = vrot.slane %v637, 2
      %v639 = vrot.slane %v603, 7
      %v640 = vrot.slane %v639, 2
      %v641 = vrot.slane %v604, 7
      %v642 = vrot.slane %v641, 2
      %v643 = vrot.slane %v605, 7
      %v644 = vrot.slane %v643, 2
      %v653 = vmax.f32 %v596, %v630
      %v654 = vmax.f32 %v600, %v632
      %v655 = vmax.f32 %v601, %v634
      %v656 = vmax.f32 %v602, %v636
      %v657 = vmax.f32 %v597, %v638
      %v658 = vmax.f32 %v603, %v640
      %v659 = vmax.f32 %v604, %v642
      %v660 = vmax.f32 %v605, %v644
      %v663 = vrot.slane %v627, 2
      %v664 = vrot.slane %v628, 2
      %v665 = vrot.slane %v627, 1
      %v666 = vrot.slane %v663, 1
      %v667 = vrot.slane %v628, 1
      %v668 = vrot.slane %v664, 1
      %v677 = vmax.f32 %v653, %v627
      %v678 = vmax.f32 %v654, %v665
      %v679 = vmax.f32 %v655, %v663
      %v680 = vmax.f32 %v656, %v666
      %v681 = vmax.f32 %v657, %v628
      %v682 = vmax.f32 %v658, %v667
      %v683 = vmax.f32 %v659, %v664
      %v684 = vmax.f32 %v660, %v668
      %vm693 = vcmask 1044484
      %v694 = vsel %vm693, %v677, %v677
      %vm695 = vcmask 1046534
      %v696 = vsel %vm695, %v677, %v694
      %v697 = vrot.slane %v678, 7
      %vm698 = vcmask 1041409
      %v699 = vsel %vm698, %v697, %v696
      %v700 = vsel %vm620, %v697, %v699
      %vm701 = vcmask 1045509
      %v702 = vsel %vm701, %v697, %v700
      %vm703 = vcmask 1047559
      %v704 = vsel %vm703, %v697, %v702
      %v705 = vsel %vm693, %v679, %v679
      %v706 = vsel %vm695, %v679, %v705
      %v707 = vrot.slane %v680, 7
      %v708 = vsel %vm698, %v707, %v706
      %v709 = vsel %vm620, %v707, %v708
      %v710 = vsel %vm701, %v707, %v709
      %v711 = vsel %vm703, %v707, %v710
      %v712 = vsel %vm693, %v681, %v681
      %v713 = vsel %vm695, %v681, %v712
      %v714 = vrot.slane %v682, 7
      %v715 = vsel %vm698, %v714, %v713
      %v716 = vsel %vm620, %v714, %v715
      %v717 = vsel %vm701, %v714, %v716
      %v718 = vsel %vm703, %v714, %v717
      %v719 = vsel %vm693, %v683, %v683
      %v720 = vsel %vm695, %v683, %v719
      %v721 = vrot.slane %v684, 7
      %v722 = vsel %vm698, %v721, %v720
      %v723 = vsel %vm620, %v721, %v722
      %v724 = vsel %vm701, %v721, %v723
      %v725 = vsel %vm703, %v721, %v724
      %v730 = vrot.slane %v718, 4
      %vm731 = vcmask 1047556
      %v732 = vsel %vm731, %v730, %v704
      %v734 = vunpack.c.l.s4 1934713408
      %v735 = vunpack.c.0.s8 %v734
      %v736 = vperm.slane %v732, %v735
      %v737 = vrot.slane %v736, 4
      %v738 = vsel %vm731, 0.0, %v737
      %v739 = vrot.slane %v725, 4
      %v740 = vsel %vm731, %v739, %v711
      %v742 = vunpack.c.l.s4 1934713408
      %v743 = vunpack.c.0.s8 %v742
      %v744 = vperm.slane %v740, %v743
      %v745 = vrot.slane %v744, 4
      %v746 = vsel %vm731, 0.0, %v745
      %748 = vst [vmem:[#allocation1] ss:$4 sm:$0xff] %v738
      %v749 = vld.sshfl [vmem:[#allocation1] sm:$0xff pattern:$0x73625140]
      %750 = vrot.lane.b32.xlu0 %v749, 32
      %v751 = vpop.permute.xlu0 %750
      %754 = vst [vmem:[#allocation1] ss:$4 sm:$0xff] %v744
      %v755 = vld.sshfl [vmem:[#allocation1] sm:$0xff pattern:$0x73625140]
      %756 = vrot.lane.b32.xlu0 %v755, 64
      %v757 = vpop.permute.xlu0 %756
      %760 = vst [vmem:[#allocation1] ss:$4 sm:$0xff] %v746
      %v761 = vld.sshfl [vmem:[#allocation1] sm:$0xff pattern:$0x73625140]
      %762 = vrot.lane.b32.xlu0 %v761, 96
      %v763 = vpop.permute.xlu0 %762
      %vm765 = vcmask 261120
      %v766 = vsel %vm765, %v736, %v751
      %vm767 = vcmask 523264
      %v768 = vsel %vm767, %v766, %v757
      %vm769 = vcmask 785408
      %v770 = vsel %vm769, %v768, %v763
      %771 = vst [vmem:[%s229] sm:$0x3] %v770
      %s772 = smul.u32 %s19, 2
      %s773 = sadd.s32 %s772, %s20
      %p774 = scmp.lt.s32.totalorder %s773, 3
      %s775 = scalar_select %p774, %s773, 3
      %s776 = smul.addr %s775, 2
      %s777 = scalar_lea.vmem %s4, %s776
      // Predicated region
      $region37: #{conv_maxpool_pallas.1} parent=35 // pred_check
        %p778 = pneg %p142
      $region38: #{conv_maxpool_pallas.1} parent=35 // pred_check_branch
        %780 = sbr.rel (%p778) target = $region40
      $region39: #{conv_maxpool_pallas.1} parent=35 // pred_region
        %s781 = smul.u32 %s19, 2
        %s782 = sadd.s32 %s781, %s20
      $region40: #{conv_maxpool_pallas.1} parent=35 // pred_fallthru
        _
    $region36: #{conv_maxpool_pallas.1} parent=5 // pred_fallthru
      _
    %p783 = scmp.le.s32.totalorder 2, %s10
    // Predicated region
    $region41: #{conv_maxpool_pallas.1} parent=5 // pred_check
      %p784 = pneg %p783
    $region42: #{conv_maxpool_pallas.1} parent=5 // pred_check_branch
      %786 = sbr.rel (%p784) target = $region44
    $region43: #{conv_maxpool_pallas.1} parent=5 // pred_region
      %s787 = ssub.s32 %s10, 2
      // Predicated region
      $region45: #{conv_maxpool_pallas.1} parent=43 // pred_check
        %p788 = pneg %p148
      $region46: #{conv_maxpool_pallas.1} parent=43 // pred_check_branch
        %790 = sbr.rel (%p788) target = $region48
      $region47: #{conv_maxpool_pallas.1} parent=43 // pred_region
        %s791 = smul.u32 %s21, 2
        %s792 = sadd.s32 %s791, %s22
        %p793 = scmp.lt.s32.totalorder %s792, 3
        %s794 = scalar_select %p793, %s792, 3
        %s795 = smul.addr %s794, 2
        %s796 = scalar_lea.vmem %s4, %s795
      $region48: #{conv_maxpool_pallas.1} parent=43 // pred_fallthru
        _
    $region44: #{conv_maxpool_pallas.1} parent=5 // pred_fallthru
      _
  $region6: #{conv_maxpool_pallas.1} parent=0 // loop_footer
    %s14 = sadd.s32 1, %s10
  $region7: #{conv_maxpool_pallas.1} parent=0 // loop_footer_branch
    %9 = sbr.rel target = $region3
  $region8: #{conv_maxpool_pallas.1} parent=0 // loop_exit
    _

</llo_original>
